<compile_context>
chip_gen: v6e
topology: v6e:2x2x1
jax: 0.10.0
libtpu: 0.0.40
codegen_flags: <defaults>
</compile_context>

<pallas_src>
import functools

import numpy as np
import jax
import jax.numpy as jnp
from jax.experimental import pallas as pl
from jax.experimental.pallas import tpu as pltpu


def _gaussian_taps_1d(kernel_size: int) -> tuple:
    """1D Gaussian taps; outer(t, t) reproduces the module's normalized 2D
    kernel exactly (the 2D Gaussian is separable, sum(outer) == sum(g1)**2)."""
    mean = (kernel_size - 1) / 2.0
    variance = (kernel_size / 6.0) ** 2.0
    coord = np.arange(kernel_size, dtype=np.float64)
    g = np.exp(-((coord - mean) ** 2) / (2.0 * variance))
    g = g / g.sum()
    return tuple(float(v) for v in g)


def _gauss_blur_kernel(x_ref, o_ref, xcol_ref, tcol_ref, *, taps, pad, h, w):
    # x_ref:    (TB, H,  W )   unpadded input planes (auto-pipelined block)
    # o_ref:    (TB, Ho, Wo)   output planes
    # xcol_ref: (TB, HV, WV)   f32 scratch; input copied to [row0:, col0:]
    # tcol_ref: (TB, Ho, Wp)   f32 scratch holding the vertical-pass result
    ksz = len(taps)
    ho = h + 2 * pad - ksz + 1
    wo = w + 2 * pad - ksz + 1
    wp = w + 2 * pad
    row0 = -(-pad // 8) * 8        # sublane-aligned start of the interior copy
    col0 = -(-pad // 128) * 128    # lane-aligned start of the interior copy
    r0 = row0 - pad                # first padded row read by the taps
    c0 = col0 - pad                # first padded column read by the taps
    tb = x_ref.shape[0]
    f32 = jnp.float32

    # ---- fused zero padding: zero ONLY the border strips the taps read ----
    # (re-zeroed every step: the scratch persists across grid steps and on a
    #  2-core v7x each core starts at a different program_id, so a "zero once"
    #  guard would be unsafe; the strips are tiny compared to the old full-
    #  block zero.)
    if pad > 0:
        zrow = jnp.zeros((tb, pad, wp), f32)
        xcol_ref[:, r0:row0, c0:c0 + wp] = zrow                      # top rows
        xcol_ref[:, row0 + h:row0 + h + pad, c0:c0 + wp] = zrow      # bottom rows
        zcol = jnp.zeros((tb, h, pad), f32)
        xcol_ref[:, row0:row0 + h, c0:col0] = zcol                   # left cols
        xcol_ref[:, row0:row0 + h, col0 + w:col0 + w + pad] = zcol   # right cols

    # Interior copy: destination starts at (row 8, col 128) -> sublane- and
    # lane-aligned; for production-sized W this is an unmasked lane-dense vst.
    xcol_ref[:, row0:row0 + h, col0:col0 + w] = x_ref[...].astype(f32)

    def fir(terms):
        # pairwise tree-sum: short dependency chain keeps the VALU slots busy
        while len(terms) > 1:
            nxt = [terms[i] + terms[i + 1] for i in range(0, len(terms) - 1, 2)]
            if len(terms) % 2:
                nxt.append(terms[-1])
            terms = nxt
        return terms[0]

    # ---- vertical 5-tap pass: ref-sliced loads (sublane offsets r0+k, lane
    #      offset c0), lane-aligned full-width store into the tcol scratch ----
    tcol_ref[...] = fir(
        [taps[k] * xcol_ref[:, r0 + k:r0 + k + ho, c0:c0 + wp]
         for k in range(ksz)])

    # ---- horizontal 5-tap pass: ref-sliced loads (lane offsets 0..4),
    #      lane-aligned output store -----------------------------------------
    out = fir([taps[k] * tcol_ref[:, :, k:k + wo] for k in range(ksz)])
    o_ref[...] = out.astype(o_ref.dtype)


def _vmem_capacity_bytes():
    """Physical per-TensorCore VMEM; conservative (v7x-sized) fallback."""
    try:
        cap = int(pltpu.get_tpu_info().vmem_capacity_bytes)
        if cap >= 32 * 2 ** 20:
            return cap
    except Exception:
        pass
    return 64 * 2 ** 20


def _pick_tb(p, per_plane_bytes, budget_bytes):
    """Largest plane batch that (a) fits the VMEM budget and (b) divides P
    exactly (no ragged tail), preferring an even number of grid steps so the
    two v7x TensorCores split the grid evenly."""
    max_tb = max(1, min(p, budget_bytes // max(per_plane_bytes, 1)))
    divisors = [t for t in range(1, max_tb + 1) if p % t == 0]
    if not divisors:
        return 1
    best = divisors[-1]
    even = [t for t in divisors if (p // t) % 2 == 0]
    if even and even[-1] * 2 >= best:
        return even[-1]
    return best


def gaussian_filter(x: jnp.ndarray, kernel_size: int = 5, stride: int = 1,
                    padding: int = 4) -> jnp.ndarray:
    """Forward pass of GaussianFilter. x: (N, 3, H, W) -> (N, 3, H+4, W+4)."""
    assert stride == 1, "only stride=1 (module default) is implemented"
    n, c, h, w = x.shape
    ksz, pad = kernel_size, padding
    ho = h + 2 * pad - ksz + 1
    wo = w + 2 * pad - ksz + 1
    wp = w + 2 * pad
    row0 = -(-pad // 8) * 8
    col0 = -(-pad // 128) * 128
    hv = row0 + h + pad
    wv = col0 + w + pad
    p = n * c

    taps = _gaussian_taps_1d(ksz)

    # Complete per-plane footprint: double-buffered in/out blocks, both f32
    # scratches and ~2 live block-sized temporaries from the two passes.
    itemsize = x.dtype.itemsize
    per_plane = (2 * (h * w + ho * wo) * itemsize
                 + (hv * wv + ho * wp) * 4
                 + 2 * ho * wp * 4)

    cap = _vmem_capacity_bytes()                       # 64 MiB v7x, 128 MiB v5e/v6e
    budget = max(8 * 2 ** 20, (cap - 16 * 2 ** 20) // 2)
    tb = _pick_tb(p, per_plane, budget)
    grid = p // tb

    params = {"dimension_semantics": ("parallel",)}
    est = tb * per_plane
    if 2 * est > 16 * 2 ** 20:
        # Only raise the scoped-VMEM limit when the estimate needs it; always
        # leave >=16 MiB of physical headroom for compiler temporaries.
        params["vmem_limit_bytes"] = int(min(max(2 * est, 32 * 2 ** 20),
                                             cap - 16 * 2 ** 20))

    kernel = functools.partial(_gauss_blur_kernel, taps=taps, pad=pad, h=h, w=w)

    xf = x.reshape(p, h, w)  # leading-dim merge only; no data movement
    out = pl.pallas_call(
        kernel,
        out_shape=jax.ShapeDtypeStruct((p, ho, wo), x.dtype),
        grid=(grid,),
        in_specs=[pl.BlockSpec((tb, h, w), lambda i: (i, 0, 0))],
        out_specs=pl.BlockSpec((tb, ho, wo), lambda i: (i, 0, 0)),
        scratch_shapes=[pltpu.VMEM((tb, hv, wv), jnp.float32),
                        pltpu.VMEM((tb, ho, wp), jnp.float32)],
        compiler_params=pltpu.CompilerParams(**params),
    )(xf)

    return out.reshape(n, c, ho, wo)


def _reference(x, kernel_size=5, padding=4):
    """Pure-JAX reference: depthwise conv with the module's full 2D kernel."""
    mean = (kernel_size - 1) / 2.0
    variance = (kernel_size / 6.0) ** 2.0
    coord = np.arange(kernel_size, dtype=np.float32)
    xg = np.tile(coord, (kernel_size, 1))
    yg = xg.T
    g = np.exp(-((xg - mean) ** 2 + (yg - mean) ** 2) / (2.0 * variance))
    w2d = jnp.asarray((g / g.sum()).astype(np.float32))
    cch = x.shape[1]
    weight = jnp.broadcast_to(w2d[None, None], (cch, 1, kernel_size, kernel_size))
    return jax.lax.conv_general_dilated(
        x, weight,
        window_strides=(1, 1),
        padding=[(padding, padding), (padding, padding)],
        dimension_numbers=("NCHW", "OIHW", "NCHW"),
        feature_group_count=cch,
    )


if __name__ == "__main__":
    key = jax.random.PRNGKey(0)
    # The module is a groups=3 depthwise conv over RGB => 3 input channels.
    x = jax.random.normal(key, (2, 3, 16, 16), dtype=jnp.float32)

    out = jax.block_until_ready(gaussian_filter(x))
    assert out.shape == (2, 3, 20, 20), out.shape

    ref = jax.block_until_ready(_reference(x))
    err = float(jnp.max(jnp.abs(out - ref)))
    assert err < 1e-5, f"max abs error {err}"

    print("KERNEL_OK")
</pallas_src>

<mosaic_0001>
module attributes {stable_mosaic.version = 11 : i64} {
  func.func @_gauss_blur_kernel(%arg0: i32, %arg1: memref<3x16x16xf32, #tpu.memory_space<vmem>>, %arg2: memref<3x20x20xf32, #tpu.memory_space<vmem>>, %arg3: memref<3x28x148xf32, #tpu.memory_space<vmem>>, %arg4: memref<3x20x24xf32, #tpu.memory_space<vmem>>) attributes {dimension_semantics = [#tpu.dimension_semantics<parallel>], iteration_bounds = array<i64: 2>, scalar_prefetch = 0 : i64, scratch_operands = 2 : i64, tpu.core_type = #tpu.core_type<tc>, window_params = [{transform_indices = @transform_0, window_bounds = array<i64: 3, 16, 16>}, {transform_indices = @transform_1, window_bounds = array<i64: 3, 20, 20>}]} {
    %cst = arith.constant 0.000000e+00 : f32
    %0 = vector.broadcast %cst : f32 to vector<3x4x24xf32>
    %c0 = arith.constant 0 : index
    %c4 = arith.constant 4 : index
    %c124 = arith.constant 124 : index
    %1 = vector.load %arg3[%c0, %c4, %c124] : memref<3x28x148xf32, #tpu.memory_space<vmem>>, vector<3x4x24xf32>
    tpu.vector_store %arg3[%c0, %c4, %c124], %0 {strides = array<i32>} : memref<3x28x148xf32, #tpu.memory_space<vmem>>, vector<3x4x24xf32>,
    %c0_0 = arith.constant 0 : index
    %c24 = arith.constant 24 : index
    %c124_1 = arith.constant 124 : index
    %2 = vector.load %arg3[%c0_0, %c24, %c124_1] : memref<3x28x148xf32, #tpu.memory_space<vmem>>, vector<3x4x24xf32>
    tpu.vector_store %arg3[%c0_0, %c24, %c124_1], %0 {strides = array<i32>} : memref<3x28x148xf32, #tpu.memory_space<vmem>>, vector<3x4x24xf32>,
    %cst_2 = arith.constant 0.000000e+00 : f32
    %3 = vector.broadcast %cst_2 : f32 to vector<3x16x4xf32>
    %c0_3 = arith.constant 0 : index
    %c8 = arith.constant 8 : index
    %c124_4 = arith.constant 124 : index
    %4 = vector.load %arg3[%c0_3, %c8, %c124_4] : memref<3x28x148xf32, #tpu.memory_space<vmem>>, vector<3x16x4xf32>
    tpu.vector_store %arg3[%c0_3, %c8, %c124_4], %3 {strides = array<i32>} : memref<3x28x148xf32, #tpu.memory_space<vmem>>, vector<3x16x4xf32>,
    %c0_5 = arith.constant 0 : index
    %c8_6 = arith.constant 8 : index
    %c144 = arith.constant 144 : index
    %5 = vector.load %arg3[%c0_5, %c8_6, %c144] : memref<3x28x148xf32, #tpu.memory_space<vmem>>, vector<3x16x4xf32>
    tpu.vector_store %arg3[%c0_5, %c8_6, %c144], %3 {strides = array<i32>} : memref<3x28x148xf32, #tpu.memory_space<vmem>>, vector<3x16x4xf32>,
    %c0_7 = arith.constant 0 : index
    %c0_8 = arith.constant 0 : index
    %c0_9 = arith.constant 0 : index
    %6 = vector.load %arg1[%c0_7, %c0_8, %c0_9] : memref<3x16x16xf32, #tpu.memory_space<vmem>>, vector<3x16x16xf32>
    %c0_10 = arith.constant 0 : index
    %c8_11 = arith.constant 8 : index
    %c128 = arith.constant 128 : index
    %7 = vector.load %arg3[%c0_10, %c8_11, %c128] : memref<3x28x148xf32, #tpu.memory_space<vmem>>, vector<3x16x16xf32>
    tpu.vector_store %arg3[%c0_10, %c8_11, %c128], %6 {strides = array<i32>} : memref<3x28x148xf32, #tpu.memory_space<vmem>>, vector<3x16x16xf32>,
    %c0_12 = arith.constant 0 : index
    %c4_13 = arith.constant 4 : index
    %c124_14 = arith.constant 124 : index
    %8 = vector.load %arg3[%c0_12, %c4_13, %c124_14] : memref<3x28x148xf32, #tpu.memory_space<vmem>>, vector<3x20x24xf32>
    %cst_15 = arith.constant 0.0269131567 : f32
    %9 = vector.broadcast %cst_15 : f32 to vector<3x20x24xf32>
    %10 = arith.mulf %9, %8 : vector<3x20x24xf32>
    %c0_16 = arith.constant 0 : index
    %c5 = arith.constant 5 : index
    %c124_17 = arith.constant 124 : index
    %11 = vector.load %arg3[%c0_16, %c5, %c124_17] : memref<3x28x148xf32, #tpu.memory_space<vmem>>, vector<3x20x24xf32>
    %cst_18 = arith.constant 0.233367682 : f32
    %12 = vector.broadcast %cst_18 : f32 to vector<3x20x24xf32>
    %13 = arith.mulf %12, %11 : vector<3x20x24xf32>
    %c0_19 = arith.constant 0 : index
    %c6 = arith.constant 6 : index
    %c124_20 = arith.constant 124 : index
    %14 = vector.load %arg3[%c0_19, %c6, %c124_20] : memref<3x28x148xf32, #tpu.memory_space<vmem>>, vector<3x20x24xf32>
    %cst_21 = arith.constant 0.479438305 : f32
    %15 = vector.broadcast %cst_21 : f32 to vector<3x20x24xf32>
    %16 = arith.mulf %15, %14 : vector<3x20x24xf32>
    %c0_22 = arith.constant 0 : index
    %c7 = arith.constant 7 : index
    %c124_23 = arith.constant 124 : index
    %17 = vector.load %arg3[%c0_22, %c7, %c124_23] : memref<3x28x148xf32, #tpu.memory_space<vmem>>, vector<3x20x24xf32>
    %cst_24 = arith.constant 0.233367682 : f32
    %18 = vector.broadcast %cst_24 : f32 to vector<3x20x24xf32>
    %19 = arith.mulf %18, %17 : vector<3x20x24xf32>
    %c0_25 = arith.constant 0 : index
    %c8_26 = arith.constant 8 : index
    %c124_27 = arith.constant 124 : index
    %20 = vector.load %arg3[%c0_25, %c8_26, %c124_27] : memref<3x28x148xf32, #tpu.memory_space<vmem>>, vector<3x20x24xf32>
    %cst_28 = arith.constant 0.0269131567 : f32
    %21 = vector.broadcast %cst_28 : f32 to vector<3x20x24xf32>
    %22 = arith.mulf %21, %20 : vector<3x20x24xf32>
    %23 = arith.addf %10, %13 : vector<3x20x24xf32>
    %24 = arith.addf %16, %19 : vector<3x20x24xf32>
    %25 = arith.addf %23, %24 : vector<3x20x24xf32>
    %26 = arith.addf %25, %22 : vector<3x20x24xf32>
    %c0_29 = arith.constant 0 : index
    %c0_30 = arith.constant 0 : index
    %c0_31 = arith.constant 0 : index
    %27 = vector.load %arg4[%c0_29, %c0_30, %c0_31] : memref<3x20x24xf32, #tpu.memory_space<vmem>>, vector<3x20x24xf32>
    tpu.vector_store %arg4[%c0_29, %c0_30, %c0_31], %26 {strides = array<i32>} : memref<3x20x24xf32, #tpu.memory_space<vmem>>, vector<3x20x24xf32>,
    %c0_32 = arith.constant 0 : index
    %c0_33 = arith.constant 0 : index
    %c0_34 = arith.constant 0 : index
    %28 = vector.load %arg4[%c0_32, %c0_33, %c0_34] : memref<3x20x24xf32, #tpu.memory_space<vmem>>, vector<3x20x20xf32>
    %cst_35 = arith.constant 0.0269131567 : f32
    %29 = vector.broadcast %cst_35 : f32 to vector<3x20x20xf32>
    %30 = arith.mulf %29, %28 : vector<3x20x20xf32>
    %c0_36 = arith.constant 0 : index
    %c0_37 = arith.constant 0 : index
    %c1 = arith.constant 1 : index
    %31 = vector.load %arg4[%c0_36, %c0_37, %c1] : memref<3x20x24xf32, #tpu.memory_space<vmem>>, vector<3x20x20xf32>
    %cst_38 = arith.constant 0.233367682 : f32
    %32 = vector.broadcast %cst_38 : f32 to vector<3x20x20xf32>
    %33 = arith.mulf %32, %31 : vector<3x20x20xf32>
    %c0_39 = arith.constant 0 : index
    %c0_40 = arith.constant 0 : index
    %c2 = arith.constant 2 : index
    %34 = vector.load %arg4[%c0_39, %c0_40, %c2] : memref<3x20x24xf32, #tpu.memory_space<vmem>>, vector<3x20x20xf32>
    %cst_41 = arith.constant 0.479438305 : f32
    %35 = vector.broadcast %cst_41 : f32 to vector<3x20x20xf32>
    %36 = arith.mulf %35, %34 : vector<3x20x20xf32>
    %c0_42 = arith.constant 0 : index
    %c0_43 = arith.constant 0 : index
    %c3 = arith.constant 3 : index
    %37 = vector.load %arg4[%c0_42, %c0_43, %c3] : memref<3x20x24xf32, #tpu.memory_space<vmem>>, vector<3x20x20xf32>
    %cst_44 = arith.constant 0.233367682 : f32
    %38 = vector.broadcast %cst_44 : f32 to vector<3x20x20xf32>
    %39 = arith.mulf %38, %37 : vector<3x20x20xf32>
    %c0_45 = arith.constant 0 : index
    %c0_46 = arith.constant 0 : index
    %c4_47 = arith.constant 4 : index
    %40 = vector.load %arg4[%c0_45, %c0_46, %c4_47] : memref<3x20x24xf32, #tpu.memory_space<vmem>>, vector<3x20x20xf32>
    %cst_48 = arith.constant 0.0269131567 : f32
    %41 = vector.broadcast %cst_48 : f32 to vector<3x20x20xf32>
    %42 = arith.mulf %41, %40 : vector<3x20x20xf32>
    %43 = arith.addf %30, %33 : vector<3x20x20xf32>
    %44 = arith.addf %36, %39 : vector<3x20x20xf32>
    %45 = arith.addf %43, %44 : vector<3x20x20xf32>
    %46 = arith.addf %45, %42 : vector<3x20x20xf32>
    %c0_49 = arith.constant 0 : index
    %c0_50 = arith.constant 0 : index
    %c0_51 = arith.constant 0 : index
    %47 = vector.load %arg2[%c0_49, %c0_50, %c0_51] : memref<3x20x20xf32, #tpu.memory_space<vmem>>, vector<3x20x20xf32>
    tpu.vector_store %arg2[%c0_49, %c0_50, %c0_51], %46 {strides = array<i32>} : memref<3x20x20xf32, #tpu.memory_space<vmem>>, vector<3x20x20xf32>,
    return
  }
  func.func @transform_0(%arg0: i32) -> (i32, i32, i32) {
    %c0_i32 = arith.constant 0 : i32
    %c0_i32_0 = arith.constant 0 : i32
    %c0_i32_1 = arith.constant 0 : i32
    return %arg0, %c0_i32, %c0_i32_0 : i32, i32, i32
  }
  func.func @transform_1(%arg0: i32) -> (i32, i32, i32) {
    %c0_i32 = arith.constant 0 : i32
    %c0_i32_0 = arith.constant 0 : i32
    %c0_i32_1 = arith.constant 0 : i32
    return %arg0, %c0_i32, %c0_i32_0 : i32, i32, i32
  }
}

</mosaic_0001>

<llo_original>
// kernel: tpu_custom_call.1
$region0: #{tpu_custom_call.1}
  #allocation0 [shape = 'u32[]', space=smem, size = 0x4, offset = 0x4, fixed_abs, tag = 'smem constant byte address 0x4 - core index']
  #allocation1 [shape = 'u32[144,128]{1,0:T(1,128)}', space=vmem, size = 0x12000, scoped, tag = 'internal scratch']
  #allocation2 [shape = 'f32[3,28,148]{2,1,0:T(8,128)}', space=vmem, size = 0x18000, scoped, tag = 'scratch operand']
  #allocation3 [shape = 'f32[3,20,24]{2,1,0:T(8,128)}', space=vmem, size = 0x9000, scoped, tag = 'scratch operand']
  %s0 = inlined_call_operand.hbm [shape: f32[6,16,16], index: 0, kind: input, shape index: {}]
  %s1 = inlined_call_operand.hbm [shape: f32[6,20,20], index: 1, kind: output, shape index: {}]
  %s2 = sld [smem:[#allocation0]]
  $region41: #{tpu_custom_call.1} parent=0
    _
  %s4 = ssub.s32 1, %s2
  %s5 = scalar_select 0, %s4, %s2
  $region1: #{tpu_custom_call.1} parent=0
    #allocation4 [shape = 'u8[49152]{0}', space=vmem, size = 0xc000, scoped, tag = 'input window, operand 0']
    #allocation5 [shape = 's32[2]{0}', space=sflag, size = 0x8, scoped, tag = 'scoped memory for tpu_custom_call.1']
    #allocation6 [shape = 's32[2]{0}', space=sflag, size = 0x8, scoped, tag = 'scoped memory for tpu_custom_call.1']
    #allocation7 [shape = 'u8[73728]{0}', space=vmem, size = 0x12000, scoped, tag = 'output window, operand 0']
    %6 = vsyncpa [#allocation5], 0
    %s7 = scalar_lea.sflag [#allocation5], 1
    %8 = vsyncpa %s7, 0
    %9 = vsyncpa [#allocation6], 0
    %s10 = scalar_lea.sflag [#allocation6], 1
    %11 = vsyncpa %s10, 0
    loop: start=0, step=1, limit=4
    $region2: #{tpu_custom_call.1} parent=1 // loop_pre_header
      _
    $region3: #{tpu_custom_call.1} parent=1 // loop_header
      %s13 = sphi 0, %s17
      %p14 = scmp.ge.s32.totalorder %s13, 4
      %s23 = sphi 0, %s25
      %s26 = sphi 0, %s23
      %s27 = sphi 0, %s26
      %s43 = sphi 0, %s27
      %s49 = sphi 0, %s51
      %s52 = sphi 0, %s49
      %s53 = sphi 0, %s52
      %s69 = sphi 0, %s53
    $region4: #{tpu_custom_call.1} parent=1 // loop_header_branch
      %16 = sbr.rel (%p14) target = $region8
    $region5: #{tpu_custom_call.1} parent=1 // loop_body
      %s18 = ssub.s32 %s13, 1
      %s19 = ssub.s32 %s13, 2
      %s20 = sadd.s32 %s13, 1
      %s21 = ssub.s32 %s13, %s20
      %p22 = scmp.eq.s32.totalorder %s21, 0
      %s24 = sadd.s32 %s23, 1
      %s25 = scalar_select %p22, %s23, %s24
      %p28 = pneg %p22
      %p29 = scmp.eq.s32.totalorder %s13, 1
      %p30 = por %p28, %p29
      %p31 = scmp.ne.s32.totalorder %s23, %s26
      %p32 = scmp.eq.s32.totalorder %s13, 0
      %p33 = por %p31, %p32
      %p34 = scmp.ne.s32.totalorder %s23, %s26
      %p35 = scmp.eq.s32.totalorder %s18, 1
      %p36 = por %p34, %p35
      %p37 = scmp.ne.s32.totalorder %s26, %s27
      %p38 = scmp.eq.s32.totalorder %s18, 0
      %p39 = por %p37, %p38
      %p40 = scmp.ne.s32.totalorder %s26, %s27
      %p41 = scmp.eq.s32.totalorder %s19, 1
      %p42 = por %p40, %p41
      %p44 = scmp.ne.s32.totalorder %s27, %s43
      %p45 = scmp.eq.s32.totalorder %s19, 0
      %p46 = por %p44, %p45
      %s47 = ssub.s32 %s13, %s20
      %p48 = scmp.eq.s32.totalorder %s47, 0
      %s50 = sadd.s32 %s49, 1
      %s51 = scalar_select %p48, %s49, %s50
      %p54 = pneg %p48
      %p55 = scmp.eq.s32.totalorder %s13, 1
      %p56 = por %p54, %p55
      %p57 = scmp.ne.s32.totalorder %s49, %s52
      %p58 = scmp.eq.s32.totalorder %s13, 0
      %p59 = por %p57, %p58
      %p60 = scmp.ne.s32.totalorder %s49, %s52
      %p61 = scmp.eq.s32.totalorder %s18, 1
      %p62 = por %p60, %p61
      %p63 = scmp.ne.s32.totalorder %s52, %s53
      %p64 = scmp.eq.s32.totalorder %s18, 0
      %p65 = por %p63, %p64
      %p66 = scmp.ne.s32.totalorder %s52, %s53
      %p67 = scmp.eq.s32.totalorder %s19, 1
      %p68 = por %p66, %p67
      %p70 = scmp.ne.s32.totalorder %s53, %s69
      %p71 = scmp.eq.s32.totalorder %s19, 0
      %p72 = por %p70, %p71
      %p73 = scmp.le.s32.totalorder 1, %s13
      %p74 = scmp.lt.s32.totalorder %s13, 3
      %p75 = pnand %p73, %p74
      %p76 = pneg %p75
      // Predicated region
      $region9: #{tpu_custom_call.1} parent=5 // pred_check
        _
      $region10: #{tpu_custom_call.1} parent=5 // pred_check_branch
        %78 = sbr.rel (%p75) target = $region12
      $region11: #{tpu_custom_call.1} parent=5 // pred_region
        %s79 = ssub.s32 %s13, 1
      $region12: #{tpu_custom_call.1} parent=5 // pred_fallthru
        _
      %p80 = scmp.lt.s32.totalorder %s13, 2
      // Predicated region
      $region13: #{tpu_custom_call.1} parent=5 // pred_check
        %p81 = pneg %p80
      $region14: #{tpu_custom_call.1} parent=5 // pred_check_branch
        %83 = sbr.rel (%p81) target = $region16
      $region15: #{tpu_custom_call.1} parent=5 // pred_region
        // Predicated region
        $region17: #{tpu_custom_call.1} parent=15 // pred_check
          %p84 = pneg %p33
        $region18: #{tpu_custom_call.1} parent=15 // pred_check_branch
          %86 = sbr.rel (%p84) target = $region20
        $region19: #{tpu_custom_call.1} parent=15 // pred_region
          %s87 = sand.u32 %s23, 1
          %s88 = scalar_lea.sflag [#allocation5], %s87
          %s89 = sand.u32 %s23, 1
          %s90 = smul.addr %s89, 48
          %s91 = scalar_lea.vmem [#allocation4], %s90
          %s92 = smul.u32 3, %s13
          %s94 = ssub.s32 768, 768
          %95 = vsyncadd %s88, %s94
          %s96 = smul.addr %s92, 2
          %s97 = smul.addr %s96, 128
          %s98 = scalar_lea.hbm %s0, %s97
          %s99 = sshll.u32 %s91, 4
          %s100 = int_to_ptr.vmem [resolvable:$true] %s99
          %105 = dma.hbm_to_vmem [thread:$0]  %s98, 768, %s100, %s88, 128, 128, 8
        $region20: #{tpu_custom_call.1} parent=15 // pred_fallthru
          _
      $region16: #{tpu_custom_call.1} parent=5 // pred_fallthru
        _
      %p106 = scmp.le.s32.totalorder 1, %s13
      %p107 = scmp.lt.s32.totalorder %s13, 3
      %p108 = pnand %p106, %p107
      %p109 = pneg %p108
      // Predicated region
      $region21: #{tpu_custom_call.1} parent=5 // pred_check
        _
      $region22: #{tpu_custom_call.1} parent=5 // pred_check_branch
        %111 = sbr.rel (%p108) target = $region24
      $region23: #{tpu_custom_call.1} parent=5 // pred_region
        %s112 = ssub.s32 %s13, 1
        %s113 = sand.u32 %s26, 1
        %s114 = scalar_lea.sflag [#allocation5], %s113
        %s115 = sand.u32 %s26, 1
        %s116 = smul.addr %s115, 48
        %s117 = scalar_lea.vmem [#allocation4], %s116
        // Predicated region
        $region25: #{tpu_custom_call.1} parent=23 // pred_check
          %p118 = pneg %p39
        $region26: #{tpu_custom_call.1} parent=23 // pred_check_branch
          %120 = sbr.rel (%p118) target = $region28
        $region27: #{tpu_custom_call.1} parent=23 // pred_region
          %121 = dma.done %s114, 768
        $region28: #{tpu_custom_call.1} parent=23 // pred_fallthru
          _
        %s122 = sand.u32 %s26, 1
        %s123 = scalar_lea.sflag [#allocation5], %s122
        %s124 = sand.u32 %s26, 1
        %s125 = smul.addr %s124, 48
        %s126 = scalar_lea.vmem [#allocation4], %s125
        %p127 = pneg %p39
        %p128 = pneg %p36
        %p129 = pneg %p65
        %p130 = pneg %p62
        %s131 = sand.u32 %s52, 1
        %s132 = scalar_lea.sflag [#allocation6], %s131
        %s133 = sand.u32 %s52, 1
        %s134 = smul.addr %s133, 72
        %s135 = scalar_lea.vmem [#allocation7], %s134
        %s136 = smul.u32 3, %s18
        %s137 = smul.u32 3, %s18
        %vm138 = vcmask 1048548
        %139 = vst.msk [vmem:[#allocation2] sm:$0xf0] %vm138, 0.0
        %vm140 = vcmask 162820
        %141 = vst.msk [vmem:[#allocation2 + $0x8] sm:$0xf0] %vm140, 0.0
        %142 = vst.msk [vmem:[#allocation2 + $0x40] sm:$0xf0] %vm138, 0.0
        %143 = vst.msk [vmem:[#allocation2 + $0x48] sm:$0xf0] %vm140, 0.0
        %144 = vst.msk [vmem:[#allocation2 + $0x80] sm:$0xf0] %vm138, 0.0
        %145 = vst.msk [vmem:[#allocation2 + $0x88] sm:$0xf0] %vm140, 0.0
        %vm146 = vcmask 1044448
        %147 = vst.msk [vmem:[#allocation2 + $0x30] sm:$0xf] %vm146, 0.0
        %vm148 = vcmask 158720
        %149 = vst.msk [vmem:[#allocation2 + $0x38] sm:$0xf] %vm148, 0.0
        %150 = vst.msk [vmem:[#allocation2 + $0x70] sm:$0xf] %vm146, 0.0
        %151 = vst.msk [vmem:[#allocation2 + $0x78] sm:$0xf] %vm148, 0.0
        %152 = vst.msk [vmem:[#allocation2 + $0xb0] sm:$0xf] %vm146, 0.0
        %153 = vst.msk [vmem:[#allocation2 + $0xb8] sm:$0xf] %vm148, 0.0
        %vm154 = vcmask 1048544
        %155 = vst.msk [vmem:[#allocation2 + $0x10] sm:$0xff] %vm154, 0.0
        %156 = vst.msk [vmem:[#allocation2 + $0x20] sm:$0xff] %vm154, 0.0
        %157 = vst.msk [vmem:[#allocation2 + $0x50] sm:$0xff] %vm154, 0.0
        %158 = vst.msk [vmem:[#allocation2 + $0x60] sm:$0xff] %vm154, 0.0
        %159 = vst.msk [vmem:[#allocation2 + $0x90] sm:$0xff] %vm154, 0.0
        %160 = vst.msk [vmem:[#allocation2 + $0xa0] sm:$0xff] %vm154, 0.0
        %vm161 = vcmask 162944
        %162 = vst.msk [vmem:[#allocation2 + $0x18] sm:$0xff] %vm161, 0.0
        %163 = vst.msk [vmem:[#allocation2 + $0x28] sm:$0xff] %vm161, 0.0
        %164 = vst.msk [vmem:[#allocation2 + $0x58] sm:$0xff] %vm161, 0.0
        %165 = vst.msk [vmem:[#allocation2 + $0x68] sm:$0xff] %vm161, 0.0
        %166 = vst.msk [vmem:[#allocation2 + $0x98] sm:$0xff] %vm161, 0.0
        %167 = vst.msk [vmem:[#allocation2 + $0xa8] sm:$0xff] %vm161, 0.0
        %v168 = vld [vmem:[%s117] sm:$0xff]
        %v169 = vld [vmem:[%s117 + $0x8] sm:$0xff]
        %v170 = vld [vmem:[%s117 + $0x10] sm:$0xff]
        %v171 = vld [vmem:[%s117 + $0x18] sm:$0xff]
        %v172 = vld [vmem:[%s117 + $0x20] sm:$0xff]
        %v173 = vld [vmem:[%s117 + $0x28] sm:$0xff]
        %vm174 = vcmask 130048
        %175 = vst.msk [vmem:[#allocation2 + $0x18] sm:$0xff] %vm174, %v168
        %176 = vst.msk [vmem:[#allocation2 + $0x28] sm:$0xff] %vm174, %v169
        %177 = vst.msk [vmem:[#allocation2 + $0x58] sm:$0xff] %vm174, %v170
        %178 = vst.msk [vmem:[#allocation2 + $0x68] sm:$0xff] %vm174, %v171
        %179 = vst.msk [vmem:[#allocation2 + $0x98] sm:$0xff] %vm174, %v172
        %180 = vst.msk [vmem:[#allocation2 + $0xa8] sm:$0xff] %vm174, %v173
        %v181 = vld [vmem:[#allocation2] sm:$0xf0]
        %v182 = vld [vmem:[#allocation2 + $0x8] sm:$0xf0]
        %v183 = vld [vmem:[#allocation2 + $0x10] sm:$0xff]
        %v184 = vld [vmem:[#allocation2 + $0x18] sm:$0xff]
        %v185 = vld [vmem:[#allocation2 + $0x20] sm:$0xff]
        %v186 = vld [vmem:[#allocation2 + $0x28] sm:$0xff]
        %v187 = vld [vmem:[#allocation2 + $0x40] sm:$0xf0]
        %v188 = vld [vmem:[#allocation2 + $0x48] sm:$0xf0]
        %v189 = vld [vmem:[#allocation2 + $0x50] sm:$0xff]
        %v190 = vld [vmem:[#allocation2 + $0x58] sm:$0xff]
        %v191 = vld [vmem:[#allocation2 + $0x60] sm:$0xff]
        %v192 = vld [vmem:[#allocation2 + $0x68] sm:$0xff]
        %v193 = vld [vmem:[#allocation2 + $0x80] sm:$0xf0]
        %v194 = vld [vmem:[#allocation2 + $0x88] sm:$0xf0]
        %v195 = vld [vmem:[#allocation2 + $0x90] sm:$0xff]
        %v196 = vld [vmem:[#allocation2 + $0x98] sm:$0xff]
        %v197 = vld [vmem:[#allocation2 + $0xa0] sm:$0xff]
        %v198 = vld [vmem:[#allocation2 + $0xa8] sm:$0xff]
        %v199 = vmul.f32 %v181, 0.026913157
        %v200 = vmul.f32 %v182, 0.026913157
        %v201 = vmul.f32 %v183, 0.026913157
        %v202 = vmul.f32 %v184, 0.026913157
        %v203 = vmul.f32 %v185, 0.026913157
        %v204 = vmul.f32 %v186, 0.026913157
        %v205 = vmul.f32 %v187, 0.026913157
        %v206 = vmul.f32 %v188, 0.026913157
        %v207 = vmul.f32 %v189, 0.026913157
        %v208 = vmul.f32 %v190, 0.026913157
        %v209 = vmul.f32 %v191, 0.026913157
        %v210 = vmul.f32 %v192, 0.026913157
        %v211 = vmul.f32 %v193, 0.026913157
        %v212 = vmul.f32 %v194, 0.026913157
        %v213 = vmul.f32 %v195, 0.026913157
        %v214 = vmul.f32 %v196, 0.026913157
        %v215 = vmul.f32 %v197, 0.026913157
        %v216 = vmul.f32 %v198, 0.026913157
        %v217 = vld [vmem:[#allocation2] sm:$0xe0]
        %v218 = vld [vmem:[#allocation2 + $0x8] sm:$0xe0]
        %v219 = vld [vmem:[#allocation2 + $0x30] sm:$0x1]
        %v220 = vld [vmem:[#allocation2 + $0x38] sm:$0x1]
        %v221 = vld [vmem:[#allocation2 + $0x40] sm:$0xe0]
        %v222 = vld [vmem:[#allocation2 + $0x48] sm:$0xe0]
        %v223 = vld [vmem:[#allocation2 + $0x70] sm:$0x1]
        %v224 = vld [vmem:[#allocation2 + $0x78] sm:$0x1]
        %v225 = vld [vmem:[#allocation2 + $0x80] sm:$0xe0]
        %v226 = vld [vmem:[#allocation2 + $0x88] sm:$0xe0]
        %v227 = vld [vmem:[#allocation2 + $0xb0] sm:$0x1]
        %v228 = vld [vmem:[#allocation2 + $0xb8] sm:$0x1]
        %v229 = vmul.f32 %v217, 0.23336768
        %v230 = vmul.f32 %v218, 0.23336768
        %v231 = vmul.f32 %v183, 0.23336768
        %v232 = vmul.f32 %v184, 0.23336768
        %v233 = vmul.f32 %v185, 0.23336768
        %v234 = vmul.f32 %v186, 0.23336768
        %v235 = vmul.f32 %v219, 0.23336768
        %v236 = vmul.f32 %v220, 0.23336768
        %v237 = vmul.f32 %v221, 0.23336768
        %v238 = vmul.f32 %v222, 0.23336768
        %v239 = vmul.f32 %v189, 0.23336768
        %v240 = vmul.f32 %v190, 0.23336768
        %v241 = vmul.f32 %v191, 0.23336768
        %v242 = vmul.f32 %v192, 0.23336768
        %v243 = vmul.f32 %v223, 0.23336768
        %v244 = vmul.f32 %v224, 0.23336768
        %v245 = vmul.f32 %v225, 0.23336768
        %v246 = vmul.f32 %v226, 0.23336768
        %v247 = vmul.f32 %v195, 0.23336768
        %v248 = vmul.f32 %v196, 0.23336768
        %v249 = vmul.f32 %v197, 0.23336768
        %v250 = vmul.f32 %v198, 0.23336768
        %v251 = vmul.f32 %v227, 0.23336768
        %v252 = vmul.f32 %v228, 0.23336768
        %v253 = vld [vmem:[#allocation2] sm:$0xc0]
        %v254 = vld [vmem:[#allocation2 + $0x8] sm:$0xc0]
        %v255 = vld [vmem:[#allocation2 + $0x30] sm:$0x3]
        %v256 = vld [vmem:[#allocation2 + $0x38] sm:$0x3]
        %v257 = vld [vmem:[#allocation2 + $0x40] sm:$0xc0]
        %v258 = vld [vmem:[#allocation2 + $0x48] sm:$0xc0]
        %v259 = vld [vmem:[#allocation2 + $0x70] sm:$0x3]
        %v260 = vld [vmem:[#allocation2 + $0x78] sm:$0x3]
        %v261 = vld [vmem:[#allocation2 + $0x80] sm:$0xc0]
        %v262 = vld [vmem:[#allocation2 + $0x88] sm:$0xc0]
        %v263 = vld [vmem:[#allocation2 + $0xb0] sm:$0x3]
        %v264 = vld [vmem:[#allocation2 + $0xb8] sm:$0x3]
        %v265 = vmul.f32 %v253, 0.4794383
        %v266 = vmul.f32 %v254, 0.4794383
        %v267 = vmul.f32 %v183, 0.4794383
        %v268 = vmul.f32 %v184, 0.4794383
        %v269 = vmul.f32 %v185, 0.4794383
        %v270 = vmul.f32 %v186, 0.4794383
        %v271 = vmul.f32 %v255, 0.4794383
        %v272 = vmul.f32 %v256, 0.4794383
        %v273 = vmul.f32 %v257, 0.4794383
        %v274 = vmul.f32 %v258, 0.4794383
        %v275 = vmul.f32 %v189, 0.4794383
        %v276 = vmul.f32 %v190, 0.4794383
        %v277 = vmul.f32 %v191, 0.4794383
        %v278 = vmul.f32 %v192, 0.4794383
        %v279 = vmul.f32 %v259, 0.4794383
        %v280 = vmul.f32 %v260, 0.4794383
        %v281 = vmul.f32 %v261, 0.4794383
        %v282 = vmul.f32 %v262, 0.4794383
        %v283 = vmul.f32 %v195, 0.4794383
        %v284 = vmul.f32 %v196, 0.4794383
        %v285 = vmul.f32 %v197, 0.4794383
        %v286 = vmul.f32 %v198, 0.4794383
        %v287 = vmul.f32 %v263, 0.4794383
        %v288 = vmul.f32 %v264, 0.4794383
        %v289 = vld [vmem:[#allocation2] sm:$0x80]
        %v290 = vld [vmem:[#allocation2 + $0x8] sm:$0x80]
        %v291 = vld [vmem:[#allocation2 + $0x30] sm:$0x7]
        %v292 = vld [vmem:[#allocation2 + $0x38] sm:$0x7]
        %v293 = vld [vmem:[#allocation2 + $0x40] sm:$0x80]
        %v294 = vld [vmem:[#allocation2 + $0x48] sm:$0x80]
        %v295 = vld [vmem:[#allocation2 + $0x70] sm:$0x7]
        %v296 = vld [vmem:[#allocation2 + $0x78] sm:$0x7]
        %v297 = vld [vmem:[#allocation2 + $0x80] sm:$0x80]
        %v298 = vld [vmem:[#allocation2 + $0x88] sm:$0x80]
        %v299 = vld [vmem:[#allocation2 + $0xb0] sm:$0x7]
        %v300 = vld [vmem:[#allocation2 + $0xb8] sm:$0x7]
        %v301 = vmul.f32 %v289, 0.23336768
        %v302 = vmul.f32 %v290, 0.23336768
        %v303 = vmul.f32 %v291, 0.23336768
        %v304 = vmul.f32 %v292, 0.23336768
        %v305 = vmul.f32 %v293, 0.23336768
        %v306 = vmul.f32 %v294, 0.23336768
        %v307 = vmul.f32 %v295, 0.23336768
        %v308 = vmul.f32 %v296, 0.23336768
        %v309 = vmul.f32 %v297, 0.23336768
        %v310 = vmul.f32 %v298, 0.23336768
        %v311 = vmul.f32 %v299, 0.23336768
        %v312 = vmul.f32 %v300, 0.23336768
        %v313 = vld [vmem:[#allocation2 + $0x30] sm:$0xf]
        %v314 = vld [vmem:[#allocation2 + $0x38] sm:$0xf]
        %v315 = vld [vmem:[#allocation2 + $0x70] sm:$0xf]
        %v316 = vld [vmem:[#allocation2 + $0x78] sm:$0xf]
        %v317 = vld [vmem:[#allocation2 + $0xb0] sm:$0xf]
        %v318 = vld [vmem:[#allocation2 + $0xb8] sm:$0xf]
        %v319 = vmul.f32 %v313, 0.026913157
        %v320 = vmul.f32 %v314, 0.026913157
        %v321 = vmul.f32 %v315, 0.026913157
        %v322 = vmul.f32 %v316, 0.026913157
        %v323 = vmul.f32 %v317, 0.026913157
        %v324 = vmul.f32 %v318, 0.026913157
        %vm349 = vcmask 1046528
        %v350 = vrot.slane %v229, 1
        %v351 = vrot.slane %v231, 1
        %v352 = vsel %vm349, %v350, %v351
        %v353 = vrot.slane %v230, 1
        %v354 = vrot.slane %v232, 1
        %v355 = vsel %vm349, %v353, %v354
        %v356 = vrot.slane %v233, 1
        %v357 = vsel %vm349, %v351, %v356
        %v358 = vrot.slane %v234, 1
        %v359 = vsel %vm349, %v354, %v358
        %v360 = vrot.slane %v235, 1
        %v361 = vsel %vm349, %v356, %v360
        %v362 = vrot.slane %v236, 1
        %v363 = vsel %vm349, %v358, %v362
        %v364 = vrot.slane %v237, 1
        %v365 = vrot.slane %v239, 1
        %v366 = vsel %vm349, %v364, %v365
        %v367 = vrot.slane %v238, 1
        %v368 = vrot.slane %v240, 1
        %v369 = vsel %vm349, %v367, %v368
        %v370 = vrot.slane %v241, 1
        %v371 = vsel %vm349, %v365, %v370
        %v372 = vrot.slane %v242, 1
        %v373 = vsel %vm349, %v368, %v372
        %v374 = vrot.slane %v243, 1
        %v375 = vsel %vm349, %v370, %v374
        %v376 = vrot.slane %v244, 1
        %v377 = vsel %vm349, %v372, %v376
        %v378 = vrot.slane %v245, 1
        %v379 = vrot.slane %v247, 1
        %v380 = vsel %vm349, %v378, %v379
        %v381 = vrot.slane %v246, 1
        %v382 = vrot.slane %v248, 1
        %v383 = vsel %vm349, %v381, %v382
        %v384 = vrot.slane %v249, 1
        %v385 = vsel %vm349, %v379, %v384
        %v386 = vrot.slane %v250, 1
        %v387 = vsel %vm349, %v382, %v386
        %v388 = vrot.slane %v251, 1
        %v389 = vsel %vm349, %v384, %v388
        %v390 = vrot.slane %v252, 1
        %v391 = vsel %vm349, %v386, %v390
        %v410 = vadd.f32 %v199, %v352
        %v411 = vadd.f32 %v200, %v355
        %v412 = vadd.f32 %v201, %v357
        %v413 = vadd.f32 %v202, %v359
        %v414 = vadd.f32 %v203, %v361
        %v415 = vadd.f32 %v204, %v363
        %v416 = vadd.f32 %v205, %v366
        %v417 = vadd.f32 %v206, %v369
        %v418 = vadd.f32 %v207, %v371
        %v419 = vadd.f32 %v208, %v373
        %v420 = vadd.f32 %v209, %v375
        %v421 = vadd.f32 %v210, %v377
        %v422 = vadd.f32 %v211, %v380
        %v423 = vadd.f32 %v212, %v383
        %v424 = vadd.f32 %v213, %v385
        %v425 = vadd.f32 %v214, %v387
        %v426 = vadd.f32 %v215, %v389
        %v427 = vadd.f32 %v216, %v391
        %v440 = vrot.slane %v301, 1
        %v441 = vsel %vm349, %v440, %v351
        %v442 = vrot.slane %v302, 1
        %v443 = vsel %vm349, %v442, %v354
        %v444 = vrot.slane %v303, 1
        %v445 = vsel %vm349, %v356, %v444
        %v446 = vrot.slane %v304, 1
        %v447 = vsel %vm349, %v358, %v446
        %v448 = vrot.slane %v305, 1
        %v449 = vsel %vm349, %v448, %v365
        %v450 = vrot.slane %v306, 1
        %v451 = vsel %vm349, %v450, %v368
        %v452 = vrot.slane %v307, 1
        %v453 = vsel %vm349, %v370, %v452
        %v454 = vrot.slane %v308, 1
        %v455 = vsel %vm349, %v372, %v454
        %v456 = vrot.slane %v309, 1
        %v457 = vsel %vm349, %v456, %v379
        %v458 = vrot.slane %v310, 1
        %v459 = vsel %vm349, %v458, %v382
        %v460 = vrot.slane %v311, 1
        %v461 = vsel %vm349, %v384, %v460
        %v462 = vrot.slane %v312, 1
        %v463 = vsel %vm349, %v386, %v462
        %v482 = vadd.f32 %v265, %v441
        %v483 = vadd.f32 %v266, %v443
        %v484 = vadd.f32 %v267, %v357
        %v485 = vadd.f32 %v268, %v359
        %v486 = vadd.f32 %v269, %v445
        %v487 = vadd.f32 %v270, %v447
        %v488 = vadd.f32 %v271, %v444
        %v489 = vadd.f32 %v272, %v446
        %v490 = vadd.f32 %v273, %v449
        %v491 = vadd.f32 %v274, %v451
        %v492 = vadd.f32 %v275, %v371
        %v493 = vadd.f32 %v276, %v373
        %v494 = vadd.f32 %v277, %v453
        %v495 = vadd.f32 %v278, %v455
        %v496 = vadd.f32 %v279, %v452
        %v497 = vadd.f32 %v280, %v454
        %v498 = vadd.f32 %v281, %v457
        %v499 = vadd.f32 %v282, %v459
        %v500 = vadd.f32 %v283, %v385
        %v501 = vadd.f32 %v284, %v387
        %v502 = vadd.f32 %v285, %v461
        %v503 = vadd.f32 %v286, %v463
        %v504 = vadd.f32 %v287, %v460
        %v505 = vadd.f32 %v288, %v462
        %vm530 = vcmask 1045504
        %v531 = vrot.slane %v482, 2
        %v532 = vrot.slane %v484, 2
        %v533 = vsel %vm530, %v531, %v532
        %v534 = vrot.slane %v483, 2
        %v535 = vrot.slane %v485, 2
        %v536 = vsel %vm530, %v534, %v535
        %v537 = vrot.slane %v486, 2
        %v538 = vsel %vm530, %v532, %v537
        %v539 = vrot.slane %v487, 2
        %v540 = vsel %vm530, %v535, %v539
        %v541 = vrot.slane %v488, 2
        %v542 = vsel %vm530, %v537, %v541
        %v543 = vrot.slane %v489, 2
        %v544 = vsel %vm530, %v539, %v543
        %v545 = vrot.slane %v490, 2
        %v546 = vrot.slane %v492, 2
        %v547 = vsel %vm530, %v545, %v546
        %v548 = vrot.slane %v491, 2
        %v549 = vrot.slane %v493, 2
        %v550 = vsel %vm530, %v548, %v549
        %v551 = vrot.slane %v494, 2
        %v552 = vsel %vm530, %v546, %v551
        %v553 = vrot.slane %v495, 2
        %v554 = vsel %vm530, %v549, %v553
        %v555 = vrot.slane %v496, 2
        %v556 = vsel %vm530, %v551, %v555
        %v557 = vrot.slane %v497, 2
        %v558 = vsel %vm530, %v553, %v557
        %v559 = vrot.slane %v498, 2
        %v560 = vrot.slane %v500, 2
        %v561 = vsel %vm530, %v559, %v560
        %v562 = vrot.slane %v499, 2
        %v563 = vrot.slane %v501, 2
        %v564 = vsel %vm530, %v562, %v563
        %v565 = vrot.slane %v502, 2
        %v566 = vsel %vm530, %v560, %v565
        %v567 = vrot.slane %v503, 2
        %v568 = vsel %vm530, %v563, %v567
        %v569 = vrot.slane %v504, 2
        %v570 = vsel %vm530, %v565, %v569
        %v571 = vrot.slane %v505, 2
        %v572 = vsel %vm530, %v567, %v571
        %v591 = vadd.f32 %v410, %v533
        %v592 = vadd.f32 %v411, %v536
        %v593 = vadd.f32 %v412, %v538
        %v594 = vadd.f32 %v413, %v540
        %v595 = vadd.f32 %v414, %v542
        %v596 = vadd.f32 %v415, %v544
        %v597 = vadd.f32 %v416, %v547
        %v598 = vadd.f32 %v417, %v550
        %v599 = vadd.f32 %v418, %v552
        %v600 = vadd.f32 %v419, %v554
        %v601 = vadd.f32 %v420, %v556
        %v602 = vadd.f32 %v421, %v558
        %v603 = vadd.f32 %v422, %v561
        %v604 = vadd.f32 %v423, %v564
        %v605 = vadd.f32 %v424, %v566
        %v606 = vadd.f32 %v425, %v568
        %v607 = vadd.f32 %v426, %v570
        %v608 = vadd.f32 %v427, %v572
        %vm627 = vcmask 1043456
        %v628 = vrot.slane %v201, 4
        %v629 = vrot.slane %v202, 4
        %v630 = vrot.slane %v203, 4
        %v631 = vsel %vm627, %v628, %v630
        %v632 = vrot.slane %v204, 4
        %v633 = vsel %vm627, %v629, %v632
        %v634 = vrot.slane %v319, 4
        %v635 = vsel %vm627, %v630, %v634
        %v636 = vrot.slane %v320, 4
        %v637 = vsel %vm627, %v632, %v636
        %v638 = vrot.slane %v207, 4
        %v639 = vrot.slane %v208, 4
        %v640 = vrot.slane %v209, 4
        %v641 = vsel %vm627, %v638, %v640
        %v642 = vrot.slane %v210, 4
        %v643 = vsel %vm627, %v639, %v642
        %v644 = vrot.slane %v321, 4
        %v645 = vsel %vm627, %v640, %v644
        %v646 = vrot.slane %v322, 4
        %v647 = vsel %vm627, %v642, %v646
        %v648 = vrot.slane %v213, 4
        %v649 = vrot.slane %v214, 4
        %v650 = vrot.slane %v215, 4
        %v651 = vsel %vm627, %v648, %v650
        %v652 = vrot.slane %v216, 4
        %v653 = vsel %vm627, %v649, %v652
        %v654 = vrot.slane %v323, 4
        %v655 = vsel %vm627, %v650, %v654
        %v656 = vrot.slane %v324, 4
        %v657 = vsel %vm627, %v652, %v656
        %v676 = vadd.f32 %v591, %v628
        %v677 = vadd.f32 %v592, %v629
        %v678 = vadd.f32 %v593, %v631
        %v679 = vadd.f32 %v594, %v633
        %v680 = vadd.f32 %v595, %v635
        %v681 = vadd.f32 %v596, %v637
        %v682 = vadd.f32 %v597, %v638
        %v683 = vadd.f32 %v598, %v639
        %v684 = vadd.f32 %v599, %v641
        %v685 = vadd.f32 %v600, %v643
        %v686 = vadd.f32 %v601, %v645
        %v687 = vadd.f32 %v602, %v647
        %v688 = vadd.f32 %v603, %v648
        %v689 = vadd.f32 %v604, %v649
        %v690 = vadd.f32 %v605, %v651
        %v691 = vadd.f32 %v606, %v653
        %v692 = vadd.f32 %v607, %v655
        %v693 = vadd.f32 %v608, %v657
        %712 = vrot.lane.b32.xlu0 %v676, 4
        %v713 = vpop.permute.xlu0 %712
        %714 = vrot.lane.b32.xlu0 %v677, 4
        %v715 = vpop.permute.xlu0 %714
        %716 = vrot.lane.b32.xlu0 %v678, 4
        %v717 = vpop.permute.xlu0 %716
        %718 = vrot.lane.b32.xlu0 %v679, 4
        %v719 = vpop.permute.xlu0 %718
        %720 = vrot.lane.b32.xlu0 %v680, 4
        %v721 = vpop.permute.xlu0 %720
        %722 = vrot.lane.b32.xlu0 %v681, 4
        %v723 = vpop.permute.xlu0 %722
        %724 = vrot.lane.b32.xlu0 %v682, 4
        %v725 = vpop.permute.xlu0 %724
        %726 = vrot.lane.b32.xlu0 %v683, 4
        %v727 = vpop.permute.xlu0 %726
        %728 = vrot.lane.b32.xlu0 %v684, 4
        %v729 = vpop.permute.xlu0 %728
        %730 = vrot.lane.b32.xlu0 %v685, 4
        %v731 = vpop.permute.xlu0 %730
        %732 = vrot.lane.b32.xlu0 %v686, 4
        %v733 = vpop.permute.xlu0 %732
        %734 = vrot.lane.b32.xlu0 %v687, 4
        %v735 = vpop.permute.xlu0 %734
        %736 = vrot.lane.b32.xlu0 %v688, 4
        %v737 = vpop.permute.xlu0 %736
        %738 = vrot.lane.b32.xlu0 %v689, 4
        %v739 = vpop.permute.xlu0 %738
        %740 = vrot.lane.b32.xlu0 %v690, 4
        %v741 = vpop.permute.xlu0 %740
        %742 = vrot.lane.b32.xlu0 %v691, 4
        %v743 = vpop.permute.xlu0 %742
        %744 = vrot.lane.b32.xlu0 %v692, 4
        %v745 = vpop.permute.xlu0 %744
        %746 = vrot.lane.b32.xlu0 %v693, 4
        %v747 = vpop.permute.xlu0 %746
        %vm748 = vcmask 31744
        %v749 = vsel %vm748, %v713, %v715
        %v750 = vsel %vm748, %v717, %v719
        %v751 = vsel %vm748, %v721, %v723
        %v752 = vsel %vm748, %v725, %v727
        %v753 = vsel %vm748, %v729, %v731
        %v754 = vsel %vm748, %v733, %v735
        %v755 = vsel %vm748, %v737, %v739
        %v756 = vsel %vm748, %v741, %v743
        %v757 = vsel %vm748, %v745, %v747
        %vm767 = vcmask 195588
        %768 = vst.msk [vmem:[#allocation3 - $0x4] sm:$0xf0] %vm767, %v749
        %vm769 = vcmask 195584
        %770 = vst.msk [vmem:[#allocation3 + $0x4] sm:$0xff] %vm769, %v750
        %771 = vst.msk [vmem:[#allocation3 + $0xc] sm:$0xff] %vm769, %v751
        %772 = vst.msk [vmem:[#allocation3 + $0x14] sm:$0xf0] %vm767, %v752
        %773 = vst.msk [vmem:[#allocation3 + $0x1c] sm:$0xff] %vm769, %v753
        %774 = vst.msk [vmem:[#allocation3 + $0x24] sm:$0xff] %vm769, %v754
        %775 = vst.msk [vmem:[#allocation3 + $0x2c] sm:$0xf0] %vm767, %v755
        %776 = vst.msk [vmem:[#allocation3 + $0x34] sm:$0xff] %vm769, %v756
        %777 = vst.msk [vmem:[#allocation3 + $0x3c] sm:$0xff] %vm769, %v757
        %v778 = vld [vmem:[#allocation3] sm:$0xff]
        %v779 = vld [vmem:[#allocation3 + $0x8] sm:$0xff]
        %v780 = vld [vmem:[#allocation3 + $0x10] sm:$0xf]
        %v781 = vld [vmem:[#allocation3 + $0x18] sm:$0xff]
        %v782 = vld [vmem:[#allocation3 + $0x20] sm:$0xff]
        %v783 = vld [vmem:[#allocation3 + $0x28] sm:$0xf]
        %v784 = vld [vmem:[#allocation3 + $0x30] sm:$0xff]
        %v785 = vld [vmem:[#allocation3 + $0x38] sm:$0xff]
        %v786 = vld [vmem:[#allocation3 + $0x40] sm:$0xf]
        %v787 = vmul.f32 %v778, 0.026913157
        %v788 = vmul.f32 %v779, 0.026913157
        %v789 = vmul.f32 %v780, 0.026913157
        %v790 = vmul.f32 %v781, 0.026913157
        %v791 = vmul.f32 %v782, 0.026913157
        %v792 = vmul.f32 %v783, 0.026913157
        %v793 = vmul.f32 %v784, 0.026913157
        %v794 = vmul.f32 %v785, 0.026913157
        %v795 = vmul.f32 %v786, 0.026913157
        %v796 = vmul.f32 %v778, 0.23336768
        %v797 = vmul.f32 %v779, 0.23336768
        %v798 = vmul.f32 %v780, 0.23336768
        %v799 = vmul.f32 %v781, 0.23336768
        %v800 = vmul.f32 %v782, 0.23336768
        %v801 = vmul.f32 %v783, 0.23336768
        %v802 = vmul.f32 %v784, 0.23336768
        %v803 = vmul.f32 %v785, 0.23336768
        %v804 = vmul.f32 %v786, 0.23336768
        %v805 = vmul.f32 %v778, 0.4794383
        %v806 = vmul.f32 %v779, 0.4794383
        %v807 = vmul.f32 %v780, 0.4794383
        %v808 = vmul.f32 %v781, 0.4794383
        %v809 = vmul.f32 %v782, 0.4794383
        %v810 = vmul.f32 %v783, 0.4794383
        %v811 = vmul.f32 %v784, 0.4794383
        %v812 = vmul.f32 %v785, 0.4794383
        %v813 = vmul.f32 %v786, 0.4794383
        %823 = vrot.lane.b32.xlu0 %v796, 127
        %v824 = vpop.permute.xlu0 %823
        %825 = vrot.lane.b32.xlu0 %v797, 127
        %v826 = vpop.permute.xlu0 %825
        %827 = vrot.lane.b32.xlu0 %v798, 127
        %v828 = vpop.permute.xlu0 %827
        %829 = vrot.lane.b32.xlu0 %v799, 127
        %v830 = vpop.permute.xlu0 %829
        %831 = vrot.lane.b32.xlu0 %v800, 127
        %v832 = vpop.permute.xlu0 %831
        %833 = vrot.lane.b32.xlu0 %v801, 127
        %v834 = vpop.permute.xlu0 %833
        %835 = vrot.lane.b32.xlu0 %v802, 127
        %v836 = vpop.permute.xlu0 %835
        %837 = vrot.lane.b32.xlu0 %v803, 127
        %v838 = vpop.permute.xlu0 %837
        %839 = vrot.lane.b32.xlu0 %v804, 127
        %v840 = vpop.permute.xlu0 %839
        %v850 = vadd.f32 %v787, %v824
        %v851 = vadd.f32 %v788, %v826
        %v852 = vadd.f32 %v789, %v828
        %v853 = vadd.f32 %v790, %v830
        %v854 = vadd.f32 %v791, %v832
        %v855 = vadd.f32 %v792, %v834
        %v856 = vadd.f32 %v793, %v836
        %v857 = vadd.f32 %v794, %v838
        %v858 = vadd.f32 %v795, %v840
        %v859 = vadd.f32 %v805, %v824
        %v860 = vadd.f32 %v806, %v826
        %v861 = vadd.f32 %v807, %v828
        %v862 = vadd.f32 %v808, %v830
        %v863 = vadd.f32 %v809, %v832
        %v864 = vadd.f32 %v810, %v834
        %v865 = vadd.f32 %v811, %v836
        %v866 = vadd.f32 %v812, %v838
        %v867 = vadd.f32 %v813, %v840
        %877 = vrot.lane.b32.xlu0 %v859, 126
        %v878 = vpop.permute.xlu0 %877
        %879 = vrot.lane.b32.xlu0 %v860, 126
        %v880 = vpop.permute.xlu0 %879
        %881 = vrot.lane.b32.xlu0 %v861, 126
        %v882 = vpop.permute.xlu0 %881
        %883 = vrot.lane.b32.xlu0 %v862, 126
        %v884 = vpop.permute.xlu0 %883
        %885 = vrot.lane.b32.xlu0 %v863, 126
        %v886 = vpop.permute.xlu0 %885
        %887 = vrot.lane.b32.xlu0 %v864, 126
        %v888 = vpop.permute.xlu0 %887
        %889 = vrot.lane.b32.xlu0 %v865, 126
        %v890 = vpop.permute.xlu0 %889
        %891 = vrot.lane.b32.xlu0 %v866, 126
        %v892 = vpop.permute.xlu0 %891
        %893 = vrot.lane.b32.xlu0 %v867, 126
        %v894 = vpop.permute.xlu0 %893
        %v904 = vadd.f32 %v850, %v878
        %v905 = vadd.f32 %v851, %v880
        %v906 = vadd.f32 %v852, %v882
        %v907 = vadd.f32 %v853, %v884
        %v908 = vadd.f32 %v854, %v886
        %v909 = vadd.f32 %v855, %v888
        %v910 = vadd.f32 %v856, %v890
        %v911 = vadd.f32 %v857, %v892
        %v912 = vadd.f32 %v858, %v894
        %922 = vrot.lane.b32.xlu0 %v787, 124
        %v923 = vpop.permute.xlu0 %922
        %924 = vrot.lane.b32.xlu0 %v788, 124
        %v925 = vpop.permute.xlu0 %924
        %926 = vrot.lane.b32.xlu0 %v789, 124
        %v927 = vpop.permute.xlu0 %926
        %928 = vrot.lane.b32.xlu0 %v790, 124
        %v929 = vpop.permute.xlu0 %928
        %930 = vrot.lane.b32.xlu0 %v791, 124
        %v931 = vpop.permute.xlu0 %930
        %932 = vrot.lane.b32.xlu0 %v792, 124
        %v933 = vpop.permute.xlu0 %932
        %934 = vrot.lane.b32.xlu0 %v793, 124
        %v935 = vpop.permute.xlu0 %934
        %936 = vrot.lane.b32.xlu0 %v794, 124
        %v937 = vpop.permute.xlu0 %936
        %938 = vrot.lane.b32.xlu0 %v795, 124
        %v939 = vpop.permute.xlu0 %938
        %v949 = vadd.f32 %v904, %v923
        %v950 = vadd.f32 %v905, %v925
        %v951 = vadd.f32 %v906, %v927
        %v952 = vadd.f32 %v907, %v929
        %v953 = vadd.f32 %v908, %v931
        %v954 = vadd.f32 %v909, %v933
        %v955 = vadd.f32 %v910, %v935
        %v956 = vadd.f32 %v911, %v937
        %v957 = vadd.f32 %v912, %v939
        %vm958 = vcmask 162816
        %959 = vst.msk [vmem:[%s135] sm:$0xff] %vm958, %v949
        %960 = vst.msk [vmem:[%s135 + $0x8] sm:$0xff] %vm958, %v950
        %961 = vst.msk [vmem:[%s135 + $0x10] sm:$0xf] %vm148, %v951
        %962 = vst.msk [vmem:[%s135 + $0x18] sm:$0xff] %vm958, %v952
        %963 = vst.msk [vmem:[%s135 + $0x20] sm:$0xff] %vm958, %v953
        %964 = vst.msk [vmem:[%s135 + $0x28] sm:$0xf] %vm148, %v954
        %965 = vst.msk [vmem:[%s135 + $0x30] sm:$0xff] %vm958, %v955
        %966 = vst.msk [vmem:[%s135 + $0x38] sm:$0xff] %vm958, %v956
        %967 = vst.msk [vmem:[%s135 + $0x40] sm:$0xf] %vm148, %v957
        %s968 = sand.u32 %s52, 1
        %s969 = scalar_lea.sflag [#allocation6], %s968
        %s970 = sand.u32 %s52, 1
        %s971 = smul.addr %s970, 72
        %s972 = scalar_lea.vmem [#allocation7], %s971
        // Predicated region
        $region29: #{tpu_custom_call.1} parent=23 // pred_check
          %p973 = pneg %p62
        $region30: #{tpu_custom_call.1} parent=23 // pred_check_branch
          %975 = sbr.rel (%p973) target = $region32
        $region31: #{tpu_custom_call.1} parent=23 // pred_region
          %s976 = smul.u32 3, %s18
          %s978 = ssub.s32 1152, 1152
          %979 = vsyncadd %s969, %s978
          %s980 = smul.addr %s976, 3
          %s981 = smul.addr %s980, 128
          %s982 = scalar_lea.hbm %s1, %s981
          %s983 = sshll.u32 %s972, 4
          %s984 = int_to_ptr.vmem [resolvable:$true] %s983
          %989 = dma.vmem_to_hbm [thread:$0]  %s984, 1152, %s982, %s969, 128, 128, 8
        $region32: #{tpu_custom_call.1} parent=23 // pred_fallthru
          _
      $region24: #{tpu_custom_call.1} parent=5 // pred_fallthru
        _
      %p990 = scmp.le.s32.totalorder 2, %s13
      // Predicated region
      $region33: #{tpu_custom_call.1} parent=5 // pred_check
        %p991 = pneg %p990
      $region34: #{tpu_custom_call.1} parent=5 // pred_check_branch
        %993 = sbr.rel (%p991) target = $region36
      $region35: #{tpu_custom_call.1} parent=5 // pred_region
        %s994 = ssub.s32 %s13, 2
        // Predicated region
        $region37: #{tpu_custom_call.1} parent=35 // pred_check
          %p995 = pneg %p68
        $region38: #{tpu_custom_call.1} parent=35 // pred_check_branch
          %997 = sbr.rel (%p995) target = $region40
        $region39: #{tpu_custom_call.1} parent=35 // pred_region
          %s998 = sand.u32 %s53, 1
          %s999 = scalar_lea.sflag [#allocation6], %s998
          %s1000 = sand.u32 %s53, 1
          %s1001 = smul.addr %s1000, 72
          %s1002 = scalar_lea.vmem [#allocation7], %s1001
          %1003 = dma.done %s999, 1152
        $region40: #{tpu_custom_call.1} parent=35 // pred_fallthru
          _
      $region36: #{tpu_custom_call.1} parent=5 // pred_fallthru
        _
    $region6: #{tpu_custom_call.1} parent=1 // loop_footer
      %s17 = sadd.s32 1, %s13
    $region7: #{tpu_custom_call.1} parent=1 // loop_footer_branch
      %12 = sbr.rel target = $region3
    $region8: #{tpu_custom_call.1} parent=1 // loop_exit
      _
    %1004 = vsyncpa [#allocation5], 1
    %s1005 = scalar_lea.sflag [#allocation5], 1
    %1006 = vsyncpa %s1005, 1
    %1007 = vsyncpa [#allocation6], 1
    %s1008 = scalar_lea.sflag [#allocation6], 1
    %1009 = vsyncpa %s1008, 1

</llo_original>
